<compile_context>
chip_gen: v5e
topology: v5e:2x2
jax: 0.10.0
libtpu: 0.0.40
codegen_flags: <defaults>
</compile_context>

<pallas_src>
import jax
import jax.numpy as jnp
from jax import lax
from jax.experimental import pallas as pl
from jax.experimental.pallas import tpu as pltpu


def _round_up(x, m):
    return ((x + m - 1) // m) * m


def _linear_whole_k_kernel(x_ref, w_ref, b_ref, o_ref):
    # Entire K resident in VMEM: one MXU contraction + fused bias epilogue.
    o_ref[...] = (
        jnp.dot(x_ref[...], w_ref[...], preferred_element_type=jnp.float32)
        + b_ref[...]
    ).astype(o_ref.dtype)


def _linear_ksplit_kernel(x_ref, w_ref, b_ref, o_ref):
    # o_ref (f32) is resident across the K grid axis -> accumulate into it
    # directly; bias is added only on the final K step.
    k = pl.program_id(2)

    @pl.when(k == 0)
    def _():
        o_ref[...] = jnp.zeros_like(o_ref)

    o_ref[...] += jnp.dot(x_ref[...], w_ref[...],
                          preferred_element_type=jnp.float32)

    @pl.when(k == pl.num_programs(2) - 1)
    def _():
        o_ref[...] += b_ref[...]


def linear_forward(x, weight, bias, *, tm=512, tn=1024, tk=512,
                   whole_k_limit=2048):
    """Pallas nn.Linear forward.

    x:      (B, inp)   float32
    weight: (out, inp) float32 (PyTorch convention)
    bias:   (out,)     float32
    returns (B, out)   float32
    """
    B, K = x.shape
    N, K2 = weight.shape
    assert K == K2, "weight inner dim must match x"
    assert bias.shape == (N,)

    # Lane/sublane-aligned extents (8 sublanes, 128 lanes).
    Mp = _round_up(B, 8)
    Kp = _round_up(K, 128)
    Np = _round_up(N, 128)

    # Adaptive tiles: don't pad a small batch up to a whole 512-row tile, and
    # keep the whole reduction in VMEM (single K step) when it fits.
    tm = min(tm, Mp)
    tn = min(tn, Np)
    tk = Kp if Kp <= whole_k_limit else min(tk, Kp)
    Mp = _round_up(Mp, tm)
    Np = _round_up(Np, tn)
    Kp = _round_up(Kp, tk)

    # One-time weight pre-transpose to (K, N): MXU-natural RHS layout, so the
    # kernel is a plain (tm,tk)x(tk,tn) contraction with no per-step relayout.
    # (Weights are static in practice — cache w_p / b_p outside the hot path.)
    w_t = weight.T

    # Pad only when actually needed (jnp.pad is an extra HBM round trip).
    # Zero padding is exact: padded K columns contribute 0 to the dot; padded
    # M rows / N columns are sliced off below.
    x_p = x if (Mp, Kp) == (B, K) else jnp.pad(x, ((0, Mp - B), (0, Kp - K)))
    w_p = w_t if (Kp, Np) == (K, N) else jnp.pad(w_t, ((0, Kp - K), (0, Np - N)))
    b_p = (bias if Np == N else jnp.pad(bias, (0, Np - N))).reshape(1, Np)

    k_steps = Kp // tk
    if k_steps == 1:
        kernel = _linear_whole_k_kernel
        grid = (Mp // tm, Np // tn)
        in_specs = [
            pl.BlockSpec((tm, Kp), lambda i, j: (i, 0)),   # x tile (whole K)
            pl.BlockSpec((Kp, tn), lambda i, j: (0, j)),   # weight tile (K, N)
            pl.BlockSpec((1, tn), lambda i, j: (0, j)),    # bias tile
        ]
        out_specs = pl.BlockSpec((tm, tn), lambda i, j: (i, j))
        dims = ("parallel", "parallel")
    else:
        kernel = _linear_ksplit_kernel
        grid = (Mp // tm, Np // tn, k_steps)
        in_specs = [
            pl.BlockSpec((tm, tk), lambda i, j, k: (i, k)),  # x tile
            pl.BlockSpec((tk, tn), lambda i, j, k: (k, j)),  # weight tile (K, N)
            pl.BlockSpec((1, tn), lambda i, j, k: (0, j)),   # bias tile
        ]
        out_specs = pl.BlockSpec((tm, tn), lambda i, j, k: (i, j))
        dims = ("parallel", "parallel", "arbitrary")

    out_p = pl.pallas_call(
        kernel,
        out_shape=jax.ShapeDtypeStruct((Mp, Np), x.dtype),
        grid=grid,
        in_specs=in_specs,
        out_specs=out_specs,
        compiler_params=pltpu.CompilerParams(
            # M/N parallel (shards across the 2 TCs on v7x), K (if present) is
            # the resident-accumulator reduction axis.
            dimension_semantics=dims,
            # Double-buffered worst case (tm=512, tn=1024, K<=2048) is ~28 MiB:
            # above v5e's 16 MiB / v7x's 32 MiB scoped defaults, well inside
            # 64 MiB (v7x physical per-TC) and 128 MiB (v5e/v6e).
            vmem_limit_bytes=64 << 20,
        ),
    )(x_p, w_p, b_p)

    if (Mp, Np) != (B, N):
        out_p = out_p[:B, :N]
    return out_p
    # TODO(synk): if model tolerance allows, cast x/w to bf16 at the kernel
    # boundary (keep f32 accumulation) for ~2-3x on v6e/v7x; kept f32 to match
    # nn.Linear float32 semantics.


def _reference(x, weight, bias):
    y = lax.dot_general(
        x, weight,
        dimension_numbers=(((1,), (1,)), ((), ())),
        precision=lax.Precision.HIGHEST,
    )
    return y + bias


if __name__ == "__main__":
    key = jax.random.PRNGKey(0)

    # Case 1: small shapes consistent with SubModule(inp, out) in the test.
    batch, inp, out = 8, 32, 64
    k1, k2, k3, key = jax.random.split(key, 4)
    bound = 1.0 / (inp ** 0.5)
    x = jax.random.normal(k1, (batch, inp), dtype=jnp.float32)
    weight = jax.random.uniform(k2, (out, inp), minval=-bound, maxval=bound,
                                dtype=jnp.float32)
    bias = jax.random.uniform(k3, (out,), minval=-bound, maxval=bound,
                              dtype=jnp.float32)

    y = jax.block_until_ready(linear_forward(x, weight, bias))
    y_ref = _reference(x, weight, bias)
    assert y.shape == (batch, out)
    assert jnp.allclose(y, y_ref, atol=1e-3, rtol=1e-3)

    # Case 2: exercises the whole-K path with N padding/slicing.
    batch2, inp2, out2 = 512, 1024, 200
    k1, k2, k3, key = jax.random.split(key, 4)
    bound2 = 1.0 / (inp2 ** 0.5)
    x2 = jax.random.normal(k1, (batch2, inp2), dtype=jnp.float32)
    w2 = jax.random.uniform(k2, (out2, inp2), minval=-bound2, maxval=bound2,
                            dtype=jnp.float32)
    b2 = jax.random.uniform(k3, (out2,), minval=-bound2, maxval=bound2,
                            dtype=jnp.float32)
    y2 = jax.block_until_ready(linear_forward(x2, w2, b2))
    assert y2.shape == (batch2, out2)
    assert jnp.allclose(y2, _reference(x2, w2, b2), atol=2e-3, rtol=2e-3)

    # Case 3: large K exercises the K-split path (resident accumulator).
    batch3, inp3, out3 = 256, 4096, 384
    k1, k2, k3, key = jax.random.split(key, 4)
    bound3 = 1.0 / (inp3 ** 0.5)
    x3 = jax.random.normal(k1, (batch3, inp3), dtype=jnp.float32)
    w3 = jax.random.uniform(k2, (out3, inp3), minval=-bound3, maxval=bound3,
                            dtype=jnp.float32)
    b3 = jax.random.uniform(k3, (out3,), minval=-bound3, maxval=bound3,
                            dtype=jnp.float32)
    y3 = jax.block_until_ready(linear_forward(x3, w3, b3))
    assert y3.shape == (batch3, out3)
    assert jnp.allclose(y3, _reference(x3, w3, b3), atol=2e-3, rtol=2e-3)

    print("KERNEL_OK")
</pallas_src>

<mosaic_0001>
module attributes {stable_mosaic.version = 11 : i64} {
  func.func @_linear_whole_k_kernel(%arg0: i32, %arg1: i32, %arg2: memref<8x128xf32, #tpu.memory_space<vmem>>, %arg3: memref<128x128xf32, #tpu.memory_space<vmem>>, %arg4: memref<1x128xf32, #tpu.memory_space<vmem>>, %arg5: memref<8x128xf32, #tpu.memory_space<vmem>>) attributes {dimension_semantics = [#tpu.dimension_semantics<parallel>, #tpu.dimension_semantics<parallel>], iteration_bounds = array<i64: 1, 1>, scalar_prefetch = 0 : i64, scratch_operands = 0 : i64, tpu.core_type = #tpu.core_type<tc>, window_params = [{transform_indices = @transform_0, window_bounds = array<i64: 8, 128>}, {transform_indices = @transform_1, window_bounds = array<i64: 128, 128>}, {transform_indices = @transform_2, window_bounds = array<i64: 1, 128>}, {transform_indices = @transform_3, window_bounds = array<i64: 8, 128>}]} {
    %c0 = arith.constant 0 : index
    %c0_0 = arith.constant 0 : index
    %0 = vector.load %arg2[%c0, %c0_0] : memref<8x128xf32, #tpu.memory_space<vmem>>, vector<8x128xf32>
    %c0_1 = arith.constant 0 : index
    %c0_2 = arith.constant 0 : index
    %1 = vector.load %arg3[%c0_1, %c0_2] : memref<128x128xf32, #tpu.memory_space<vmem>>, vector<128x128xf32>
    %cst = arith.constant dense<0.000000e+00> : vector<8x128xf32>
    %2 = tpu.matmul %0, %1, %cst {dimension_numbers = #tpu.dot_dimension_numbers<[1], [0], [0], [1], [0, 0, 1, 1], [], []>} : vector<8x128xf32>, vector<128x128xf32>, vector<8x128xf32> -> vector<8x128xf32>
    %c0_3 = arith.constant 0 : index
    %c0_4 = arith.constant 0 : index
    %3 = vector.load %arg4[%c0_3, %c0_4] : memref<1x128xf32, #tpu.memory_space<vmem>>, vector<1x128xf32>
    %4 = vector.broadcast %3 : vector<1x128xf32> to vector<8x128xf32>
    %5 = arith.addf %2, %4 : vector<8x128xf32>
    %c0_5 = arith.constant 0 : index
    %c0_6 = arith.constant 0 : index
    %6 = vector.load %arg5[%c0_5, %c0_6] : memref<8x128xf32, #tpu.memory_space<vmem>>, vector<8x128xf32>
    tpu.vector_store %arg5[%c0_5, %c0_6], %5 {strides = array<i32>} : memref<8x128xf32, #tpu.memory_space<vmem>>, vector<8x128xf32>,
    return
  }
  func.func @transform_0(%arg0: i32, %arg1: i32) -> (i32, i32) {
    %c0_i32 = arith.constant 0 : i32
    %c0_i32_0 = arith.constant 0 : i32
    return %arg0, %c0_i32 : i32, i32
  }
  func.func @transform_1(%arg0: i32, %arg1: i32) -> (i32, i32) {
    %c0_i32 = arith.constant 0 : i32
    %c0_i32_0 = arith.constant 0 : i32
    return %c0_i32, %arg1 : i32, i32
  }
  func.func @transform_2(%arg0: i32, %arg1: i32) -> (i32, i32) {
    %c0_i32 = arith.constant 0 : i32
    %c0_i32_0 = arith.constant 0 : i32
    return %c0_i32, %arg1 : i32, i32
  }
  func.func @transform_3(%arg0: i32, %arg1: i32) -> (i32, i32) {
    %c0_i32 = arith.constant 0 : i32
    return %arg0, %arg1 : i32, i32
  }
}

</mosaic_0001>

<llo_original>
// kernel: tpu_custom_call.1
$region0: #{tpu_custom_call.1}
  #allocation0 [shape = 'u32[]', space=smem, size = 0x4, offset = 0x4, fixed_abs, tag = 'smem constant byte address 0x4 - core index']
  #allocation1 [shape = 'u32[72,128]{1,0:T(1,128)}', space=vmem, size = 0x9000, scoped, tag = 'internal scratch']
  %s0 = inlined_call_operand.hbm [shape: f32[8,128], index: 0, kind: input, shape index: {}]
  %s1 = inlined_call_operand.hbm [shape: f32[128,128], index: 1, kind: input, shape index: {}]
  %s2 = inlined_call_operand.vmem [shape: f32[1,128], index: 2, kind: input, shape index: {}]
  %s3 = inlined_call_operand.hbm [shape: f32[8,128], index: 3, kind: output, shape index: {}]
  %s4 = sld [smem:[#allocation0]]
  $region30: #{tpu_custom_call.1} parent=0
    _
  %s6 = ssub.s32 1, %s4
  %s7 = scalar_select 0, %s6, %s4
  $region1: #{tpu_custom_call.1} parent=0
    #allocation2 [shape = 'u8[4096]{0}', space=vmem, size = 0x1000, scoped, tag = 'input window, operand 0, single buffered']
    #allocation3 [shape = 's32[1]{0}', space=sflag, size = 0x4, scoped, tag = 'scoped memory for tpu_custom_call.1']
    #allocation4 [shape = 's32[1]{0}', space=sflag, size = 0x4, scoped, tag = 'scoped memory for tpu_custom_call.1']
    #allocation5 [shape = 'u8[65536]{0}', space=vmem, size = 0x10000, scoped, tag = 'input window, operand 1, single buffered']
    #allocation6 [shape = 's32[1]{0}', space=sflag, size = 0x4, scoped, tag = 'scoped memory for tpu_custom_call.1']
    #allocation7 [shape = 'u8[4096]{0}', space=vmem, size = 0x1000, scoped, tag = 'output window, operand 0, single buffered']
    %8 = vsyncpa [#allocation3], 0
    %9 = vsyncpa [#allocation6], 0
    %10 = vsyncpa [#allocation4], 0
    // Predicated region
    $region2: #{tpu_custom_call.1} parent=1 // pred_check
      _
    $region3: #{tpu_custom_call.1} parent=1 // pred_check_branch
      %12 = sbr.rel (0) target = $region5
    $region4: #{tpu_custom_call.1} parent=1 // pred_region
      %14 = vsyncadd [#allocation3], 0
      %s16 = sshll.u32 %s0, 4
      %s17 = int_to_ptr.hbm [resolvable:$true] %s16
      %s18 = sshll.u32 [#allocation2], 4
      %s19 = int_to_ptr.vmem [resolvable:$true] %s18
      %21 = dma.hbm_to_vmem [thread:$0]  %s17, 128, %s19, [#allocation3]
    $region5: #{tpu_custom_call.1} parent=1 // pred_fallthru
      _
    // Predicated region
    $region6: #{tpu_custom_call.1} parent=1 // pred_check
      _
    $region7: #{tpu_custom_call.1} parent=1 // pred_check_branch
      %23 = sbr.rel (0) target = $region9
    $region8: #{tpu_custom_call.1} parent=1 // pred_region
      %25 = vsyncadd [#allocation6], 0
      %s26 = sshll.u32 %s1, 4
      %s27 = int_to_ptr.hbm [resolvable:$true] %s26
      %s28 = sshll.u32 [#allocation5], 4
      %s29 = int_to_ptr.vmem [resolvable:$true] %s28
      %34 = dma.hbm_to_vmem [thread:$0]  %s27, 2048, %s29, [#allocation6], 128, 128, 8
    $region9: #{tpu_custom_call.1} parent=1 // pred_fallthru
      _
    // Predicated region
    $region10: #{tpu_custom_call.1} parent=1 // pred_check
      _
    $region11: #{tpu_custom_call.1} parent=1 // pred_check_branch
      %36 = sbr.rel (0) target = $region13
    $region12: #{tpu_custom_call.1} parent=1 // pred_region
      _
    $region13: #{tpu_custom_call.1} parent=1 // pred_fallthru
      _
    // Predicated region
    $region14: #{tpu_custom_call.1} parent=1 // pred_check
      _
    $region15: #{tpu_custom_call.1} parent=1 // pred_check_branch
      %38 = sbr.rel (0) target = $region17
    $region16: #{tpu_custom_call.1} parent=1 // pred_region
      %40 = dma.done [#allocation3], 128
    $region17: #{tpu_custom_call.1} parent=1 // pred_fallthru
      _
    // Predicated region
    $region18: #{tpu_custom_call.1} parent=1 // pred_check
      _
    $region19: #{tpu_custom_call.1} parent=1 // pred_check_branch
      %42 = sbr.rel (0) target = $region21
    $region20: #{tpu_custom_call.1} parent=1 // pred_region
      %44 = dma.done [#allocation6], 2048
    $region21: #{tpu_custom_call.1} parent=1 // pred_fallthru
      _
    %v45 = vld [vmem:[#allocation2] sm:$0xff]
    %v46 = vld [vmem:[#allocation5] sm:$0xff]
    %v47 = vld [vmem:[#allocation5 + $0x8] sm:$0xff]
    %v48 = vld [vmem:[#allocation5 + $0x10] sm:$0xff]
    %v49 = vld [vmem:[#allocation5 + $0x18] sm:$0xff]
    %v50 = vld [vmem:[#allocation5 + $0x20] sm:$0xff]
    %v51 = vld [vmem:[#allocation5 + $0x28] sm:$0xff]
    %v52 = vld [vmem:[#allocation5 + $0x30] sm:$0xff]
    %v53 = vld [vmem:[#allocation5 + $0x38] sm:$0xff]
    %v54 = vld [vmem:[#allocation5 + $0x40] sm:$0xff]
    %v55 = vld [vmem:[#allocation5 + $0x48] sm:$0xff]
    %v56 = vld [vmem:[#allocation5 + $0x50] sm:$0xff]
    %v57 = vld [vmem:[#allocation5 + $0x58] sm:$0xff]
    %v58 = vld [vmem:[#allocation5 + $0x60] sm:$0xff]
    %v59 = vld [vmem:[#allocation5 + $0x68] sm:$0xff]
    %v60 = vld [vmem:[#allocation5 + $0x70] sm:$0xff]
    %v61 = vld [vmem:[#allocation5 + $0x78] sm:$0xff]
    %v62 = vld [vmem:[%s2] sm:$0x1]
    %v64 = vperm.slane %v62, 0
    %66 = vmatpush.msra.mxu0 %v61
    %67 = vmatpush.msra.mxu0 %v60
    %68 = vmatpush.msra.mxu0 %v59
    %69 = vmatpush.msra.mxu0 %v58
    %70 = vmatpush.msra.mxu0 %v57
    %71 = vmatpush.msra.mxu0 %v56
    %72 = vmatpush.msra.mxu0 %v55
    %73 = vmatpush.msra.mxu0 %v54
    %74 = vmatpush.msra.mxu0 %v53
    %75 = vmatpush.msra.mxu0 %v52
    %76 = vmatpush.msra.mxu0 %v51
    %77 = vmatpush.msra.mxu0 %v50
    %78 = vmatpush.msra.mxu0 %v49
    %79 = vmatpush.msra.mxu0 %v48
    %80 = vmatpush.msra.mxu0 %v47
    %81 = vmatpush.msra.mxu0 %v46
    %82 = vmatmul.f32.gmra.mxu0 %v45
    %v83 = vpop.f32.mrf.mxu0
    %v84 = vadd.f32 %v64, %v83
    %85 = vdwg.mxu0
    %86 = vst [vmem:[#allocation7] sm:$0xff] %v84
    // Predicated region
    $region22: #{tpu_custom_call.1} parent=1 // pred_check
      _
    $region23: #{tpu_custom_call.1} parent=1 // pred_check_branch
      %88 = sbr.rel (0) target = $region25
    $region24: #{tpu_custom_call.1} parent=1 // pred_region
      %90 = vsyncadd [#allocation4], 0
      %s92 = sshll.u32 [#allocation7], 4
      %s93 = int_to_ptr.vmem [resolvable:$true] %s92
      %s94 = sshll.u32 %s3, 4
      %s95 = int_to_ptr.hbm [resolvable:$true] %s94
      %97 = dma.vmem_to_hbm [thread:$0]  %s93, 128, %s95, [#allocation4]
    $region25: #{tpu_custom_call.1} parent=1 // pred_fallthru
      _
    // Predicated region
    $region26: #{tpu_custom_call.1} parent=1 // pred_check
      _
    $region27: #{tpu_custom_call.1} parent=1 // pred_check_branch
      %99 = sbr.rel (0) target = $region29
    $region28: #{tpu_custom_call.1} parent=1 // pred_region
      %101 = dma.done [#allocation4], 128
    $region29: #{tpu_custom_call.1} parent=1 // pred_fallthru
      _
    %102 = vsyncpa [#allocation3], 1
    %103 = vsyncpa [#allocation6], 1
    %104 = vsyncpa [#allocation4], 1

</llo_original>
